<compile_context>
chip_gen: v6e
topology: v6e:2x2x1
jax: 0.10.0
libtpu: 0.0.40
codegen_flags: <defaults>
</compile_context>

<pallas_src>
import functools

import jax
import jax.numpy as jnp
from jax.experimental import pallas as pl
from jax.experimental.pallas import tpu as pltpu

N_EMBD = 64
HIDDEN = 4 * N_EMBD        # 256
DROPOUT_P = 0.3
MAX_TM = 512               # row-tile cap (multiple of 16 for bf16 sublane packing)


def _round_up(a, b):
    return (a + b - 1) // b * b


def _ffn_kernel(x_ref, w1_ref, b1_ref, w2_ref, b2_ref, *rest,
                training: bool, p: float):
    # x_ref: (tm, E) f32      w1_ref: (E, 4E) bf16   b1_ref: (1, 4E) f32
    # w2_ref: (4E, E) bf16    b2_ref: (1, E)  f32
    # rest = (bits_ref, o_ref) when training else (o_ref,)
    if training and p > 0.0:
        bits_ref, o_ref = rest
    else:
        (o_ref,) = rest

    x = x_ref[...].astype(jnp.bfloat16)

    # Linear 1 + ReLU (MXU bf16 matmul, f32 accumulation)
    h = jnp.dot(x, w1_ref[...], preferred_element_type=jnp.float32)
    h = jnp.maximum(h + b1_ref[...], 0.0)

    # Linear 2
    y = jnp.dot(h.astype(jnp.bfloat16), w2_ref[...],
                preferred_element_type=jnp.float32)
    y = y + b2_ref[...]

    if training and p > 0.0:
        # Inverted dropout: keep iff uint32 bits >= p * 2^32  (P(keep) = 1-p).
        thresh = jnp.uint32(min(int(p * (1 << 32)), (1 << 32) - 1))
        keep = bits_ref[...] >= thresh
        y = jnp.where(keep, y * jnp.float32(1.0 / (1.0 - p)), 0.0)

    o_ref[...] = y.astype(o_ref.dtype)


def feed_forward(x, w1, b1, w2, b2, *, key=None, training=False, p=DROPOUT_P,
                 tm=None):
    """x: (B, T, n_embd) float32 -> (B, T, n_embd) float32."""
    B, T, E = x.shape
    H = w1.shape[1]
    assert E == w1.shape[0] and w2.shape == (H, E)
    M = B * T

    # Row tile: multiple of 16 (bf16 sublane packing), capped so the grid has
    # many steps at realistic M (pipelining + v7x megacore sharding).
    if tm is None:
        tm = min(MAX_TM, _round_up(M, 16))
    tm = max(16, _round_up(tm, 16))
    Mp = _round_up(M, tm)
    grid = (Mp // tm,)

    x2 = x.reshape(M, E).astype(jnp.float32)
    if Mp != M:
        x2 = jnp.pad(x2, ((0, Mp - M), (0, 0)))

    # Weights live in VMEM for the whole grid; bf16 halves their DMA footprint.
    w1b = w1.astype(jnp.bfloat16)
    w2b = w2.astype(jnp.bfloat16)
    b1r = b1.reshape(1, H).astype(jnp.float32)
    b2r = b2.reshape(1, E).astype(jnp.float32)

    train = bool(training) and p > 0.0

    in_specs = [
        pl.BlockSpec((tm, E), lambda i: (i, 0)),    # x tile (streamed)
        pl.BlockSpec((E, H), lambda i: (0, 0)),     # W1 (resident)
        pl.BlockSpec((1, H), lambda i: (0, 0)),     # b1
        pl.BlockSpec((H, E), lambda i: (0, 0)),     # W2 (resident)
        pl.BlockSpec((1, E), lambda i: (0, 0)),     # b2
    ]
    args = [x2, w1b, b1r, w2b, b2r]

    if train:
        if key is None:
            key = jax.random.PRNGKey(0)
        bits = jax.random.bits(key, (Mp, E), dtype=jnp.uint32)
        in_specs.append(pl.BlockSpec((tm, E), lambda i: (i, 0)))   # mask bits
        args.append(bits)

    # VMEM budget sized from tm (double-buffered x/out/(bits) tiles + h
    # intermediate + bf16 weights), with headroom for compiler scratch.
    xio_bytes = tm * E * 4
    vmem_need = (2 * 2 * xio_bytes                      # x + out, double-buffered
                 + (2 * xio_bytes if train else 0)      # mask bits
                 + 2 * tm * H * 4                       # h intermediate headroom
                 + 2 * 2 * (E * H + H * E) * 2          # bf16 weights, 2 buffers
                 + (4 << 20))                           # compiler scratch slack
    vmem_limit = int(min(max(vmem_need, 16 << 20), 64 << 20))

    flops = 2 * Mp * (E * H + H * E)
    bytes_accessed = (Mp * E * 4 * 2                    # x in + y out (f32)
                      + (E * H + H * E) * 2             # bf16 weights
                      + (H + E) * 4                     # biases
                      + (Mp * E * 4 if train else 0))   # mask bits

    out2 = pl.pallas_call(
        functools.partial(_ffn_kernel, training=train, p=p),
        out_shape=jax.ShapeDtypeStruct((Mp, E), jnp.float32),
        grid_spec=pltpu.PrefetchScalarGridSpec(
            num_scalar_prefetch=0,
            grid=grid,
            in_specs=in_specs,
            out_specs=pl.BlockSpec((tm, E), lambda i: (i, 0)),
        ),
        compiler_params=pltpu.CompilerParams(
            dimension_semantics=("parallel",),
            vmem_limit_bytes=vmem_limit,
        ),
        cost_estimate=pl.CostEstimate(
            flops=flops, transcendentals=0, bytes_accessed=bytes_accessed),
    )(*args)

    return out2[:M].reshape(B, T, E)


def init_params(key, n_embd=N_EMBD):
    """Deterministic init mirroring nn.Linear shapes.
    PyTorch stores weight as (out, in); we store the transpose (in, out) so the
    kernel computes x @ W."""
    k1, k2, k3, k4 = jax.random.split(key, 4)
    hidden = 4 * n_embd
    bound1 = 1.0 / (n_embd ** 0.5)
    bound2 = 1.0 / (hidden ** 0.5)
    w1 = jax.random.uniform(k1, (n_embd, hidden), jnp.float32, -bound1, bound1)
    b1 = jax.random.uniform(k2, (hidden,), jnp.float32, -bound1, bound1)
    w2 = jax.random.uniform(k3, (hidden, n_embd), jnp.float32, -bound2, bound2)
    b2 = jax.random.uniform(k4, (n_embd,), jnp.float32, -bound2, bound2)
    return w1, b1, w2, b2


if __name__ == "__main__":
    key = jax.random.PRNGKey(0)
    kp, kx, kd = jax.random.split(key, 3)
    w1, b1, w2, b2 = init_params(kp)

    B, T = 2, 8                       # (batch, seq, n_embd) = (2, 8, 64)
    x = jax.random.normal(kx, (B, T, N_EMBD), dtype=jnp.float32)

    # Eval-mode forward through the Pallas kernel (dropout is identity).
    y = jax.block_until_ready(feed_forward(x, w1, b1, w2, b2, training=False))

    # Reference with the same bf16 MXU casts / f32 accumulation.
    xb = x.reshape(-1, N_EMBD).astype(jnp.bfloat16)
    h_ref = jnp.dot(xb, w1.astype(jnp.bfloat16),
                    preferred_element_type=jnp.float32) + b1
    h_ref = jnp.maximum(h_ref, 0.0)
    ref = jnp.dot(h_ref.astype(jnp.bfloat16), w2.astype(jnp.bfloat16),
                  preferred_element_type=jnp.float32) + b2
    ref = ref.reshape(B, T, N_EMBD)
    assert jnp.allclose(y, ref, atol=1e-3, rtol=1e-3), "mismatch vs bf16 reference"

    # Sanity vs the pure f32 math (bf16 matmul approximation is small).
    ref_f32 = (jnp.maximum(x.reshape(-1, N_EMBD) @ w1 + b1, 0.0) @ w2 + b2
               ).reshape(B, T, N_EMBD)
    assert jnp.allclose(y, ref_f32, atol=5e-2, rtol=5e-2), "mismatch vs f32 reference"

    # Training path: inverted dropout with a host-generated uint32 mask stream.
    y_train = jax.block_until_ready(
        feed_forward(x, w1, b1, w2, b2, key=kd, training=True))
    assert y_train.shape == (B, T, N_EMBD)
    # Dropout should zero roughly p of the outputs and rescale the rest.
    zero_frac = float(jnp.mean((y_train == 0.0).astype(jnp.float32)))
    assert 0.05 < zero_frac < 0.7, f"unexpected dropout zero fraction {zero_frac}"

    print("KERNEL_OK")
</pallas_src>

<mosaic_0001>
module attributes {stable_mosaic.version = 11 : i64} {
  func.func @_ffn_kernel(%arg0: i32, %arg1: memref<16x64xf32, #tpu.memory_space<vmem>>, %arg2: memref<64x256xbf16, #tpu.memory_space<vmem>>, %arg3: memref<1x256xf32, #tpu.memory_space<vmem>>, %arg4: memref<256x64xbf16, #tpu.memory_space<vmem>>, %arg5: memref<1x64xf32, #tpu.memory_space<vmem>>, %arg6: memref<16x64xf32, #tpu.memory_space<vmem>>) attributes {dimension_semantics = [#tpu.dimension_semantics<parallel>], iteration_bounds = array<i64: 1>, scalar_prefetch = 0 : i64, scratch_operands = 0 : i64, tpu.core_type = #tpu.core_type<tc>, window_params = [{transform_indices = @transform_0, window_bounds = array<i64: 16, 64>}, {pipeline_mode = #tpu.pipeline_mode<synchronous>, transform_indices = @transform_1, window_bounds = array<i64: 64, 256>}, {pipeline_mode = #tpu.pipeline_mode<synchronous>, transform_indices = @transform_2, window_bounds = array<i64: 1, 256>}, {pipeline_mode = #tpu.pipeline_mode<synchronous>, transform_indices = @transform_3, window_bounds = array<i64: 256, 64>}, {pipeline_mode = #tpu.pipeline_mode<synchronous>, transform_indices = @transform_4, window_bounds = array<i64: 1, 64>}, {transform_indices = @transform_5, window_bounds = array<i64: 16, 64>}]} {
    %c0 = arith.constant 0 : index
    %c0_0 = arith.constant 0 : index
    %0 = vector.load %arg1[%c0, %c0_0] : memref<16x64xf32, #tpu.memory_space<vmem>>, vector<16x64xf32>
    %1 = arith.truncf %0 : vector<16x64xf32> to vector<16x64xbf16>
    %c0_1 = arith.constant 0 : index
    %c0_2 = arith.constant 0 : index
    %2 = vector.load %arg2[%c0_1, %c0_2] : memref<64x256xbf16, #tpu.memory_space<vmem>>, vector<64x256xbf16>
    %cst = arith.constant dense<0.000000e+00> : vector<16x256xf32>
    %3 = tpu.matmul %1, %2, %cst {dimension_numbers = #tpu.dot_dimension_numbers<[1], [0], [0], [1], [0, 0, 1, 1], [], []>} : vector<16x64xbf16>, vector<64x256xbf16>, vector<16x256xf32> -> vector<16x256xf32>
    %c0_3 = arith.constant 0 : index
    %c0_4 = arith.constant 0 : index
    %4 = vector.load %arg3[%c0_3, %c0_4] : memref<1x256xf32, #tpu.memory_space<vmem>>, vector<1x256xf32>
    %5 = vector.broadcast %4 : vector<1x256xf32> to vector<16x256xf32>
    %6 = arith.addf %3, %5 : vector<16x256xf32>
    %cst_5 = arith.constant 0.000000e+00 : f32
    %7 = vector.broadcast %cst_5 : f32 to vector<16x256xf32>
    %8 = arith.maximumf %6, %7 : vector<16x256xf32>
    %9 = arith.truncf %8 : vector<16x256xf32> to vector<16x256xbf16>
    %c0_6 = arith.constant 0 : index
    %c0_7 = arith.constant 0 : index
    %10 = vector.load %arg4[%c0_6, %c0_7] : memref<256x64xbf16, #tpu.memory_space<vmem>>, vector<256x64xbf16>
    %cst_8 = arith.constant dense<0.000000e+00> : vector<16x64xf32>
    %11 = tpu.matmul %9, %10, %cst_8 {dimension_numbers = #tpu.dot_dimension_numbers<[1], [0], [0], [1], [0, 0, 1, 1], [], []>} : vector<16x256xbf16>, vector<256x64xbf16>, vector<16x64xf32> -> vector<16x64xf32>
    %c0_9 = arith.constant 0 : index
    %c0_10 = arith.constant 0 : index
    %12 = vector.load %arg5[%c0_9, %c0_10] : memref<1x64xf32, #tpu.memory_space<vmem>>, vector<1x64xf32>
    %13 = vector.broadcast %12 : vector<1x64xf32> to vector<16x64xf32>
    %14 = arith.addf %11, %13 : vector<16x64xf32>
    %c0_11 = arith.constant 0 : index
    %c0_12 = arith.constant 0 : index
    %15 = vector.load %arg6[%c0_11, %c0_12] : memref<16x64xf32, #tpu.memory_space<vmem>>, vector<16x64xf32>
    tpu.vector_store %arg6[%c0_11, %c0_12], %14 {strides = array<i32>} : memref<16x64xf32, #tpu.memory_space<vmem>>, vector<16x64xf32>,
    return
  }
  func.func @transform_0(%arg0: i32) -> (i32, i32) {
    %c0_i32 = arith.constant 0 : i32
    %c0_i32_0 = arith.constant 0 : i32
    return %arg0, %c0_i32 : i32, i32
  }
  func.func @transform_1(%arg0: i32) -> (i32, i32) {
    %c0_i32 = arith.constant 0 : i32
    %c0_i32_0 = arith.constant 0 : i32
    %c0_i32_1 = arith.constant 0 : i32
    return %c0_i32, %c0_i32_0 : i32, i32
  }
  func.func @transform_2(%arg0: i32) -> (i32, i32) {
    %c0_i32 = arith.constant 0 : i32
    %c0_i32_0 = arith.constant 0 : i32
    %c0_i32_1 = arith.constant 0 : i32
    return %c0_i32, %c0_i32_0 : i32, i32
  }
  func.func @transform_3(%arg0: i32) -> (i32, i32) {
    %c0_i32 = arith.constant 0 : i32
    %c0_i32_0 = arith.constant 0 : i32
    %c0_i32_1 = arith.constant 0 : i32
    return %c0_i32, %c0_i32_0 : i32, i32
  }
  func.func @transform_4(%arg0: i32) -> (i32, i32) {
    %c0_i32 = arith.constant 0 : i32
    %c0_i32_0 = arith.constant 0 : i32
    %c0_i32_1 = arith.constant 0 : i32
    return %c0_i32, %c0_i32_0 : i32, i32
  }
  func.func @transform_5(%arg0: i32) -> (i32, i32) {
    %c0_i32 = arith.constant 0 : i32
    %c0_i32_0 = arith.constant 0 : i32
    return %arg0, %c0_i32 : i32, i32
  }
}

</mosaic_0001>

<llo_original>
// kernel: tpu_custom_call.1
$region0: #{tpu_custom_call.1}
  #allocation0 [shape = 'u32[]', space=smem, size = 0x4, offset = 0x4, fixed_abs, tag = 'smem constant byte address 0x4 - core index']
  #allocation1 [shape = 'u32[144,128]{1,0:T(1,128)}', space=vmem, size = 0x12000, scoped, tag = 'internal scratch']
  %s0 = inlined_call_operand.vmem [shape: f32[16,64], index: 0, kind: input, shape index: {}]
  %s1 = inlined_call_operand.vmem [shape: bf16[64,256], index: 1, kind: input, shape index: {}]
  %s2 = inlined_call_operand.vmem [shape: f32[1,256], index: 2, kind: input, shape index: {}]
  %s3 = inlined_call_operand.vmem [shape: bf16[256,64], index: 3, kind: input, shape index: {}]
  %s4 = inlined_call_operand.vmem [shape: f32[1,64], index: 4, kind: input, shape index: {}]
  %s5 = inlined_call_operand.hbm [shape: f32[16,64], index: 5, kind: output, shape index: {}]
  %s6 = sld [smem:[#allocation0]]
  $region30: #{tpu_custom_call.1} parent=0
    _
  %s8 = ssub.s32 1, %s6
  %s9 = scalar_select 0, %s8, %s6
  $region1: #{tpu_custom_call.1} parent=0
    #allocation2 [shape = 'u8[8192]{0}', space=vmem, size = 0x2000, scoped, tag = 'output window, operand 0, single buffered']
    #allocation3 [shape = 's32[1]{0}', space=sflag, size = 0x4, scoped, tag = 'scoped memory for tpu_custom_call.1']
    %10 = vsyncpa [#allocation3], 0
    // Predicated region
    $region2: #{tpu_custom_call.1} parent=1 // pred_check
      _
    $region3: #{tpu_custom_call.1} parent=1 // pred_check_branch
      %12 = sbr.rel (0) target = $region5
    $region4: #{tpu_custom_call.1} parent=1 // pred_region
      _
    $region5: #{tpu_custom_call.1} parent=1 // pred_fallthru
      _
    // Predicated region
    $region6: #{tpu_custom_call.1} parent=1 // pred_check
      _
    $region7: #{tpu_custom_call.1} parent=1 // pred_check_branch
      %14 = sbr.rel (0) target = $region9
    $region8: #{tpu_custom_call.1} parent=1 // pred_region
      _
    $region9: #{tpu_custom_call.1} parent=1 // pred_fallthru
      _
    // Predicated region
    $region10: #{tpu_custom_call.1} parent=1 // pred_check
      _
    $region11: #{tpu_custom_call.1} parent=1 // pred_check_branch
      %16 = sbr.rel (0) target = $region13
    $region12: #{tpu_custom_call.1} parent=1 // pred_region
      _
    $region13: #{tpu_custom_call.1} parent=1 // pred_fallthru
      _
    // Predicated region
    $region14: #{tpu_custom_call.1} parent=1 // pred_check
      _
    $region15: #{tpu_custom_call.1} parent=1 // pred_check_branch
      %18 = sbr.rel (0) target = $region17
    $region16: #{tpu_custom_call.1} parent=1 // pred_region
      _
    $region17: #{tpu_custom_call.1} parent=1 // pred_fallthru
      _
    // Predicated region
    $region18: #{tpu_custom_call.1} parent=1 // pred_check
      _
    $region19: #{tpu_custom_call.1} parent=1 // pred_check_branch
      %20 = sbr.rel (0) target = $region21
    $region20: #{tpu_custom_call.1} parent=1 // pred_region
      _
    $region21: #{tpu_custom_call.1} parent=1 // pred_fallthru
      _
    %v22 = vld [vmem:[%s0] sm:$0xff]
    %v23 = vld [vmem:[%s0 + $0x8] sm:$0xff]
    %v24 = vpack.c.bf16 %v23, %v22
    %v25 = vld [vmem:[%s1] sm:$0xff]
    %v26 = vld [vmem:[%s1 + $0x8] sm:$0xff]
    %v27 = vld [vmem:[%s1 + $0x10] sm:$0xff]
    %v28 = vld [vmem:[%s1 + $0x18] sm:$0xff]
    %v29 = vld [vmem:[%s1 + $0x20] sm:$0xff]
    %v30 = vld [vmem:[%s1 + $0x28] sm:$0xff]
    %v31 = vld [vmem:[%s1 + $0x30] sm:$0xff]
    %v32 = vld [vmem:[%s1 + $0x38] sm:$0xff]
    %v33 = vld [vmem:[%s2] sm:$0x3]
    %v35 = vlaneseq
    %v36 = vshrl.u32 %v35, 7
    %v37 = vsub.s32 0, %v36
    %v38 = vrot.slane %v33, %v37
    %v39 = vlaneseq
    %v40 = vshrl.u32 %v39, 7
    %v41 = vsub.s32 1, %v40
    %v42 = vrot.slane %v33, %v41
    %v53 = vunpack.c.l.b16 %v25
    %v54 = vunpack.c.h.b16 %v25
    %v55 = vunpack.c.l.b16 %v26
    %v56 = vunpack.c.h.b16 %v26
    %v57 = vunpack.c.l.b16 %v27
    %v58 = vunpack.c.h.b16 %v27
    %v59 = vunpack.c.l.b16 %v28
    %v60 = vunpack.c.h.b16 %v28
    %v61 = vunpack.c.l.b16 %v29
    %v62 = vunpack.c.h.b16 %v29
    %v63 = vunpack.c.l.b16 %v30
    %v64 = vunpack.c.h.b16 %v30
    %v65 = vunpack.c.l.b16 %v31
    %v66 = vunpack.c.h.b16 %v31
    %v67 = vunpack.c.l.b16 %v32
    %v68 = vunpack.c.h.b16 %v32
    %v69 = vpack.c.b16 %v55, %v53
    %v70 = vpack.c.b16 %v56, %v54
    %v71 = vpack.c.b16 %v59, %v57
    %v72 = vpack.c.b16 %v60, %v58
    %v73 = vpack.c.b16 %v63, %v61
    %v74 = vpack.c.b16 %v64, %v62
    %v75 = vpack.c.b16 %v67, %v65
    %v76 = vpack.c.b16 %v68, %v66
    %vm85 = vcmask 523264
    %v87 = vsel %vm85, %v24, 0
    %89 = vmatprep.subr.bf16.mxu0 0
    %90 = vmatpush1.bf16.msra.mxu0 0
    %91 = vmatprep.subr.bf16.mxu0 0
    %92 = vmatpush1.bf16.msra.mxu0 0
    %93 = vmatprep.subr.bf16.mxu0 0
    %94 = vmatpush1.bf16.msra.mxu0 0
    %95 = vmatprep.subr.bf16.mxu0 0
    %96 = vmatpush1.bf16.msra.mxu0 0
    %97 = vmatprep.subr.bf16.mxu0 %v76
    %98 = vmatpush1.bf16.msra.mxu0 %v75
    %99 = vmatprep.subr.bf16.mxu0 %v74
    %100 = vmatpush1.bf16.msra.mxu0 %v73
    %101 = vmatprep.subr.bf16.mxu0 %v72
    %102 = vmatpush1.bf16.msra.mxu0 %v71
    %103 = vmatprep.subr.bf16.mxu0 %v70
    %104 = vmatpush1.bf16.msra.mxu0 %v69
    %105 = vmatprep.subr.bf16.mxu0 0
    %106 = vmatpush2.bf16.msra.mxu0 0
    %107 = vmatprep.subr.bf16.mxu0 0
    %108 = vmatpush2.bf16.msra.mxu0 0
    %109 = vmatprep.subr.bf16.mxu0 0
    %110 = vmatpush2.bf16.msra.mxu0 0
    %111 = vmatprep.subr.bf16.mxu0 0
    %112 = vmatpush2.bf16.msra.mxu0 0
    %113 = vmatprep.subr.bf16.mxu0 0
    %114 = vmatpush2.bf16.msra.mxu0 0
    %115 = vmatprep.subr.bf16.mxu0 0
    %116 = vmatpush2.bf16.msra.mxu0 0
    %117 = vmatprep.subr.bf16.mxu0 0
    %118 = vmatpush2.bf16.msra.mxu0 0
    %119 = vmatprep.subr.bf16.mxu0 0
    %120 = vmatpush2.bf16.msra.mxu0 0
    %121 = vmatprep.mubr.bf16.mxu0 0
    %122 = vmatmul.mubr.bf16.gmra.mxu0 %v87
    %v123 = vpop.f32.mrf.mxu0
    %v124 = vadd.f32 %v38, %v123
    %v125 = vpop.f32.mrf.mxu0
    %v126 = vadd.f32 %v42, %v125
    %v127 = vpop.f32.mrf.mxu0
    %v128 = vadd.f32 %v38, %v127
    %v129 = vpop.f32.mrf.mxu0
    %v130 = vadd.f32 %v42, %v129
    %131 = vdwg.mxu0
    %v132 = vmax.f32 %v124, 0.0
    %v133 = vmax.f32 %v126, 0.0
    %v134 = vmax.f32 %v128, 0.0
    %v135 = vmax.f32 %v130, 0.0
    %v136 = vpack.c.bf16 %v134, %v132
    %v137 = vpack.c.bf16 %v135, %v133
    %v138 = vld [vmem:[%s3] sm:$0xf]
    %v139 = vld [vmem:[%s3 + $0x4] sm:$0xf]
    %v140 = vld [vmem:[%s3 + $0x8] sm:$0xf]
    %v141 = vld [vmem:[%s3 + $0xc] sm:$0xf]
    %v142 = vld [vmem:[%s3 + $0x10] sm:$0xf]
    %v143 = vld [vmem:[%s3 + $0x14] sm:$0xf]
    %v144 = vld [vmem:[%s3 + $0x18] sm:$0xf]
    %v145 = vld [vmem:[%s3 + $0x1c] sm:$0xf]
    %v146 = vld [vmem:[%s3 + $0x20] sm:$0xf]
    %v147 = vld [vmem:[%s3 + $0x24] sm:$0xf]
    %v148 = vld [vmem:[%s3 + $0x28] sm:$0xf]
    %v149 = vld [vmem:[%s3 + $0x2c] sm:$0xf]
    %v150 = vld [vmem:[%s3 + $0x30] sm:$0xf]
    %v151 = vld [vmem:[%s3 + $0x34] sm:$0xf]
    %v152 = vld [vmem:[%s3 + $0x38] sm:$0xf]
    %v153 = vld [vmem:[%s3 + $0x3c] sm:$0xf]
    %v154 = vld [vmem:[%s3 + $0x40] sm:$0xf]
    %v155 = vld [vmem:[%s3 + $0x44] sm:$0xf]
    %v156 = vld [vmem:[%s3 + $0x48] sm:$0xf]
    %v157 = vld [vmem:[%s3 + $0x4c] sm:$0xf]
    %v158 = vld [vmem:[%s3 + $0x50] sm:$0xf]
    %v159 = vld [vmem:[%s3 + $0x54] sm:$0xf]
    %v160 = vld [vmem:[%s3 + $0x58] sm:$0xf]
    %v161 = vld [vmem:[%s3 + $0x5c] sm:$0xf]
    %v162 = vld [vmem:[%s3 + $0x60] sm:$0xf]
    %v163 = vld [vmem:[%s3 + $0x64] sm:$0xf]
    %v164 = vld [vmem:[%s3 + $0x68] sm:$0xf]
    %v165 = vld [vmem:[%s3 + $0x6c] sm:$0xf]
    %v166 = vld [vmem:[%s3 + $0x70] sm:$0xf]
    %v167 = vld [vmem:[%s3 + $0x74] sm:$0xf]
    %v168 = vld [vmem:[%s3 + $0x78] sm:$0xf]
    %v169 = vld [vmem:[%s3 + $0x7c] sm:$0xf]
    %v170 = vld [vmem:[%s4] sm:$0x1]
    %v172 = vlaneseq
    %v173 = vshrl.u32 %v172, 7
    %v174 = vsub.s32 0, %v173
    %v175 = vrot.slane %v170, %v174
    %v209 = vunpack.c.l.b16 %v138
    %v210 = vunpack.c.l.b16 %v139
    %v211 = vunpack.c.l.b16 %v140
    %v212 = vunpack.c.l.b16 %v141
    %v213 = vunpack.c.l.b16 %v142
    %v214 = vunpack.c.l.b16 %v143
    %v215 = vunpack.c.l.b16 %v144
    %v216 = vunpack.c.l.b16 %v145
    %v217 = vunpack.c.l.b16 %v146
    %v218 = vunpack.c.l.b16 %v147
    %v219 = vunpack.c.l.b16 %v148
    %v220 = vunpack.c.l.b16 %v149
    %v221 = vunpack.c.l.b16 %v150
    %v222 = vunpack.c.l.b16 %v151
    %v223 = vunpack.c.l.b16 %v152
    %v224 = vunpack.c.l.b16 %v153
    %v225 = vunpack.c.l.b16 %v154
    %v226 = vunpack.c.l.b16 %v155
    %v227 = vunpack.c.l.b16 %v156
    %v228 = vunpack.c.l.b16 %v157
    %v229 = vunpack.c.l.b16 %v158
    %v230 = vunpack.c.l.b16 %v159
    %v231 = vunpack.c.l.b16 %v160
    %v232 = vunpack.c.l.b16 %v161
    %v233 = vunpack.c.l.b16 %v162
    %v234 = vunpack.c.l.b16 %v163
    %v235 = vunpack.c.l.b16 %v164
    %v236 = vunpack.c.l.b16 %v165
    %v237 = vunpack.c.l.b16 %v166
    %v238 = vunpack.c.l.b16 %v167
    %v239 = vunpack.c.l.b16 %v168
    %v240 = vunpack.c.l.b16 %v169
    %v241 = vpack.c.b16 %v210, %v209
    %v242 = vpack.c.b16 %v212, %v211
    %v243 = vpack.c.b16 %v214, %v213
    %v244 = vpack.c.b16 %v216, %v215
    %v245 = vpack.c.b16 %v218, %v217
    %v246 = vpack.c.b16 %v220, %v219
    %v247 = vpack.c.b16 %v222, %v221
    %v248 = vpack.c.b16 %v224, %v223
    %v249 = vpack.c.b16 %v226, %v225
    %v250 = vpack.c.b16 %v228, %v227
    %v251 = vpack.c.b16 %v230, %v229
    %v252 = vpack.c.b16 %v232, %v231
    %v253 = vpack.c.b16 %v234, %v233
    %v254 = vpack.c.b16 %v236, %v235
    %v255 = vpack.c.b16 %v238, %v237
    %v256 = vpack.c.b16 %v240, %v239
    %273 = vmatprep.subr.bf16.mxu0 0
    %274 = vmatpush1.bf16.msra.mxu0 %v248
    %275 = vmatprep.subr.bf16.mxu0 0
    %276 = vmatpush1.bf16.msra.mxu0 %v247
    %277 = vmatprep.subr.bf16.mxu0 0
    %278 = vmatpush1.bf16.msra.mxu0 %v246
    %279 = vmatprep.subr.bf16.mxu0 0
    %280 = vmatpush1.bf16.msra.mxu0 %v245
    %281 = vmatprep.subr.bf16.mxu0 0
    %282 = vmatpush1.bf16.msra.mxu0 %v244
    %283 = vmatprep.subr.bf16.mxu0 0
    %284 = vmatpush1.bf16.msra.mxu0 %v243
    %285 = vmatprep.subr.bf16.mxu0 0
    %286 = vmatpush1.bf16.msra.mxu0 %v242
    %287 = vmatprep.subr.bf16.mxu0 0
    %288 = vmatpush1.bf16.msra.mxu0 %v241
    %289 = vmatprep.subr.bf16.mxu0 0
    %290 = vmatpush2.bf16.msra.mxu0 %v256
    %291 = vmatprep.subr.bf16.mxu0 0
    %292 = vmatpush2.bf16.msra.mxu0 %v255
    %293 = vmatprep.subr.bf16.mxu0 0
    %294 = vmatpush2.bf16.msra.mxu0 %v254
    %295 = vmatprep.subr.bf16.mxu0 0
    %296 = vmatpush2.bf16.msra.mxu0 %v253
    %297 = vmatprep.subr.bf16.mxu0 0
    %298 = vmatpush2.bf16.msra.mxu0 %v252
    %299 = vmatprep.subr.bf16.mxu0 0
    %300 = vmatpush2.bf16.msra.mxu0 %v251
    %301 = vmatprep.subr.bf16.mxu0 0
    %302 = vmatpush2.bf16.msra.mxu0 %v250
    %303 = vmatprep.subr.bf16.mxu0 0
    %304 = vmatpush2.bf16.msra.mxu0 %v249
    %305 = vmatprep.mubr.bf16.mxu0 %v137
    %306 = vmatmul.mubr.bf16.gmra.mxu0 %v136
    %v307 = vpop.f32.mrf.mxu0
    %v308 = vadd.f32 %v175, %v307
    %v309 = vpop.f32.mrf.mxu0
    %v310 = vpop.f32.mrf.mxu0
    %v311 = vadd.f32 %v175, %v310
    %v312 = vpop.f32.mrf.mxu0
    %313 = vdwg.mxu0
    %314 = vst.msk [vmem:[#allocation2] sm:$0xff] %vm85, %v308
    %315 = vst.msk [vmem:[#allocation2 + $0x8] sm:$0xff] %vm85, %v311
    // Predicated region
    $region22: #{tpu_custom_call.1} parent=1 // pred_check
      _
    $region23: #{tpu_custom_call.1} parent=1 // pred_check_branch
      %317 = sbr.rel (0) target = $region25
    $region24: #{tpu_custom_call.1} parent=1 // pred_region
      %s319 = ssub.s32 256, 256
      %320 = vsyncadd [#allocation3], %s319
      %s321 = sshll.u32 [#allocation2], 4
      %s322 = int_to_ptr.vmem [resolvable:$true] %s321
      %327 = dma.vmem_to_hbm [thread:$0]  %s322, 256, %s5, [#allocation3], 128, 128, 8
    $region25: #{tpu_custom_call.1} parent=1 // pred_fallthru
      _
    // Predicated region
    $region26: #{tpu_custom_call.1} parent=1 // pred_check
      _
    $region27: #{tpu_custom_call.1} parent=1 // pred_check_branch
      %329 = sbr.rel (0) target = $region29
    $region28: #{tpu_custom_call.1} parent=1 // pred_region
      %330 = dma.done [#allocation3], 256
    $region29: #{tpu_custom_call.1} parent=1 // pred_fallthru
      _
    %331 = vsyncpa [#allocation3], 1

</llo_original>
